<compile_context>
chip_gen: v7x
topology: tpu7x:2x2x1
jax: 0.10.0
libtpu: 0.0.40
codegen_flags: <defaults>
</compile_context>

<pallas_src>
import functools

import jax
import jax.numpy as jnp
from jax.experimental import pallas as pl
from jax.experimental.pallas import tpu as pltpu

IN_F, HID_F, OUT_F = 1000, 100, 10
IN_PAD, HID_PAD, OUT_PAD = 1024, 128, 128
DROP_P = 0.2
_DROP_THRESH_U32 = int(round(DROP_P * (1 << 32)))  # bits < thresh -> dropped


def _round_up(n, m):
    return ((n + m - 1) // m) * m


def _padded_batch(B, tb_max=512):
    """Batch tile size and padded batch so TB | B_pad and TB % 8 == 0."""
    TB = min(tb_max, _round_up(B, 8))
    return TB, _round_up(B, TB)


def _dropout_bits(seed, rows, cols):
    """Uniform uint32 bits for the dropout mask (per-row unique)."""
    key = jax.random.PRNGKey(seed)
    return jax.random.bits(key, (rows, cols), dtype=jnp.uint32)


def _mlp_dropout_kernel(x_ref, w1_ref, b1_ref, w2_ref, b2_ref, mask_ref,
                        o_ref, *, training: bool, drop_p: float):
    # fc1 (MXU): (TB, 1024) bf16 @ (1024, 128) bf16 -> f32 accum
    h = jnp.dot(x_ref[...], w1_ref[...], preferred_element_type=jnp.float32)
    h = jnp.maximum(h + b1_ref[...], 0.0)            # bias + ReLU, f32

    if training:
        # F.dropout(p, training=True): drop with prob p, scale kept by 1/(1-p).
        # keep iff u32 >= round(p * 2^32)  (full 32-bit resolution, no float conv)
        keep = mask_ref[...] >= jnp.uint32(_DROP_THRESH_U32)
        h = jnp.where(keep, h, 0.0) * (1.0 / (1.0 - drop_p))

    # fc2 (MXU): (TB, 128) bf16 @ (128, 128) bf16 -> f32 accum
    y = jnp.dot(h.astype(w2_ref.dtype), w2_ref[...],
                preferred_element_type=jnp.float32)
    o_ref[...] = (y + b2_ref[...]).astype(o_ref.dtype)


def net_functional_dropout(x, w1, b1, w2, b2, *, seed: int = 0,
                           training: bool = True, tb_max: int = 512):
    """x: (B, 1000) f32 -> (B, 10) f32.  w1: (1000, 100), w2: (100, 10)."""
    B = x.shape[0]
    TB, B_pad = _padded_batch(B, tb_max)
    n_tiles = B_pad // TB

    # Host-side zero-padding to lane-aligned shapes; bf16 for the fat streams.
    x_p = jnp.pad(x, ((0, B_pad - B), (0, IN_PAD - IN_F))).astype(jnp.bfloat16)
    w1_p = jnp.pad(w1, ((0, IN_PAD - IN_F), (0, HID_PAD - HID_F))).astype(jnp.bfloat16)
    b1_p = jnp.pad(b1, (0, HID_PAD - HID_F)).reshape(1, HID_PAD).astype(jnp.float32)
    w2_p = jnp.pad(w2, ((0, HID_PAD - HID_F), (0, OUT_PAD - OUT_F))).astype(jnp.bfloat16)
    b2_p = jnp.pad(b2, (0, OUT_PAD - OUT_F)).reshape(1, OUT_PAD).astype(jnp.float32)

    # Per-row-unique dropout bits: batch tiling never reuses a mask.
    mask = _dropout_bits(seed, B_pad, HID_PAD)

    kernel = functools.partial(_mlp_dropout_kernel,
                               training=training, drop_p=DROP_P)

    out = pl.pallas_call(
        kernel,
        out_shape=jax.ShapeDtypeStruct((B_pad, OUT_PAD), jnp.float32),
        grid=(n_tiles,),
        in_specs=[
            pl.BlockSpec((TB, IN_PAD),       lambda i: (i, 0)),  # x tile
            pl.BlockSpec((IN_PAD, HID_PAD),  lambda i: (0, 0)),  # w1 (resident)
            pl.BlockSpec((1, HID_PAD),       lambda i: (0, 0)),  # b1
            pl.BlockSpec((HID_PAD, OUT_PAD), lambda i: (0, 0)),  # w2 (resident)
            pl.BlockSpec((1, OUT_PAD),       lambda i: (0, 0)),  # b2
            pl.BlockSpec((TB, HID_PAD),      lambda i: (i, 0)),  # dropout bits
        ],
        out_specs=pl.BlockSpec((TB, OUT_PAD), lambda i: (i, 0)),
        compiler_params=pltpu.CompilerParams(
            dimension_semantics=("parallel",)),
    )(x_p, w1_p, b1_p, w2_p, b2_p, mask)

    return out[:B, :OUT_F]


def _init_params(key):
    """Deterministic params, mimicking nn.Linear's U(-1/sqrt(fan_in), +) init.
    Stored pre-transposed as (in, out) so the kernel does plain x @ W."""
    k1, k2, k3, k4 = jax.random.split(key, 4)
    bound1 = 1.0 / (IN_F ** 0.5)
    bound2 = 1.0 / (HID_F ** 0.5)
    w1 = jax.random.uniform(k1, (IN_F, HID_F), jnp.float32, -bound1, bound1)
    b1 = jax.random.uniform(k2, (HID_F,),      jnp.float32, -bound1, bound1)
    w2 = jax.random.uniform(k3, (HID_F, OUT_F), jnp.float32, -bound2, bound2)
    b2 = jax.random.uniform(k4, (OUT_F,),       jnp.float32, -bound2, bound2)
    return w1, b1, w2, b2


def _reference(x, w1, b1, w2, b2, *, seed, training):
    """Pure-JAX forward replicating the kernel's bf16 math and dropout mask."""
    h = jnp.dot(x.astype(jnp.bfloat16), w1.astype(jnp.bfloat16),
                preferred_element_type=jnp.float32)
    h = jnp.maximum(h + b1, 0.0)
    if training:
        B = x.shape[0]
        _, B_pad = _padded_batch(B)
        bits = _dropout_bits(seed, B_pad, HID_PAD)[:B, :HID_F]
        keep = bits >= jnp.uint32(_DROP_THRESH_U32)
        h = jnp.where(keep, h, 0.0) * (1.0 / (1.0 - DROP_P))
    y = jnp.dot(h.astype(jnp.bfloat16), w2.astype(jnp.bfloat16),
                preferred_element_type=jnp.float32)
    return y + b2


if __name__ == "__main__":
    key = jax.random.PRNGKey(0)
    k_params, k_x = jax.random.split(key)
    w1, b1, w2, b2 = _init_params(k_params)

    B = 8  # small batch
    x = jax.random.normal(k_x, (B, IN_F), jnp.float32)

    # nn.Module defaults to training=True -> dropout active.
    # TODO(synk): dropout RNG stream intentionally does not match PyTorch's;
    # only the keep-probability / scaling semantics are preserved.
    out_train = net_functional_dropout(x, w1, b1, w2, b2, seed=42, training=True)
    out_train = jax.block_until_ready(out_train)
    assert out_train.shape == (B, OUT_F) and out_train.dtype == jnp.float32
    ref_train = _reference(x, w1, b1, w2, b2, seed=42, training=True)
    assert jnp.allclose(out_train, ref_train, atol=1e-2, rtol=1e-2)

    # Deterministic (eval-mode) path.
    out_eval = net_functional_dropout(x, w1, b1, w2, b2, seed=0, training=False)
    out_eval = jax.block_until_ready(out_eval)
    ref_eval = _reference(x, w1, b1, w2, b2, seed=0, training=False)
    assert jnp.allclose(out_eval, ref_eval, atol=1e-2, rtol=1e-2)

    print("KERNEL_OK")
</pallas_src>

<mosaic_0001>
module attributes {stable_mosaic.version = 11 : i64} {
  func.func @_mlp_dropout_kernel(%arg0: i32, %arg1: memref<8x1024xbf16, #tpu.memory_space<vmem>>, %arg2: memref<1024x128xbf16, #tpu.memory_space<vmem>>, %arg3: memref<1x128xf32, #tpu.memory_space<vmem>>, %arg4: memref<128x128xbf16, #tpu.memory_space<vmem>>, %arg5: memref<1x128xf32, #tpu.memory_space<vmem>>, %arg6: memref<8x128xi32, #tpu.memory_space<vmem>>, %arg7: memref<8x128xf32, #tpu.memory_space<vmem>>) attributes {dimension_semantics = [#tpu.dimension_semantics<parallel>], iteration_bounds = array<i64: 1>, scalar_prefetch = 0 : i64, scratch_operands = 0 : i64, tpu.core_type = #tpu.core_type<tc>, window_params = [{transform_indices = @transform_0, window_bounds = array<i64: 8, 1024>}, {pipeline_mode = #tpu.pipeline_mode<synchronous>, transform_indices = @transform_1, window_bounds = array<i64: 1024, 128>}, {pipeline_mode = #tpu.pipeline_mode<synchronous>, transform_indices = @transform_2, window_bounds = array<i64: 1, 128>}, {pipeline_mode = #tpu.pipeline_mode<synchronous>, transform_indices = @transform_3, window_bounds = array<i64: 128, 128>}, {pipeline_mode = #tpu.pipeline_mode<synchronous>, transform_indices = @transform_4, window_bounds = array<i64: 1, 128>}, {transform_indices = @transform_5, window_bounds = array<i64: 8, 128>}, {transform_indices = @transform_6, window_bounds = array<i64: 8, 128>}]} {
    %c0 = arith.constant 0 : index
    %c0_0 = arith.constant 0 : index
    %0 = vector.load %arg1[%c0, %c0_0] : memref<8x1024xbf16, #tpu.memory_space<vmem>>, vector<8x1024xbf16>
    %c0_1 = arith.constant 0 : index
    %c0_2 = arith.constant 0 : index
    %1 = vector.load %arg2[%c0_1, %c0_2] : memref<1024x128xbf16, #tpu.memory_space<vmem>>, vector<1024x128xbf16>
    %cst = arith.constant dense<0.000000e+00> : vector<8x128xf32>
    %2 = tpu.matmul %0, %1, %cst {dimension_numbers = #tpu.dot_dimension_numbers<[1], [0], [0], [1], [0, 0, 1, 1], [], []>} : vector<8x1024xbf16>, vector<1024x128xbf16>, vector<8x128xf32> -> vector<8x128xf32>
    %c0_3 = arith.constant 0 : index
    %c0_4 = arith.constant 0 : index
    %3 = vector.load %arg3[%c0_3, %c0_4] : memref<1x128xf32, #tpu.memory_space<vmem>>, vector<1x128xf32>
    %4 = vector.broadcast %3 : vector<1x128xf32> to vector<8x128xf32>
    %5 = arith.addf %2, %4 : vector<8x128xf32>
    %cst_5 = arith.constant 0.000000e+00 : f32
    %6 = vector.broadcast %cst_5 : f32 to vector<8x128xf32>
    %7 = arith.maximumf %5, %6 : vector<8x128xf32>
    %c0_6 = arith.constant 0 : index
    %c0_7 = arith.constant 0 : index
    %8 = vector.load %arg6[%c0_6, %c0_7] : memref<8x128xi32, #tpu.memory_space<vmem>>, vector<8x128xi32>
    %c858993459_i32 = arith.constant 858993459 : i32
    %9 = vector.broadcast %c858993459_i32 : i32 to vector<8x128xi32>
    %10 = arith.cmpi uge, %8, %9 : vector<8x128xi32>
    %cst_8 = arith.constant 0.000000e+00 : f32
    %11 = vector.broadcast %cst_8 : f32 to vector<8x128xf32>
    %12 = arith.select %10, %7, %11 : vector<8x128xi1>, vector<8x128xf32>
    %cst_9 = arith.constant 1.250000e+00 : f32
    %13 = vector.broadcast %cst_9 : f32 to vector<8x128xf32>
    %14 = arith.mulf %12, %13 : vector<8x128xf32>
    %15 = arith.truncf %14 : vector<8x128xf32> to vector<8x128xbf16>
    %c0_10 = arith.constant 0 : index
    %c0_11 = arith.constant 0 : index
    %16 = vector.load %arg4[%c0_10, %c0_11] : memref<128x128xbf16, #tpu.memory_space<vmem>>, vector<128x128xbf16>
    %cst_12 = arith.constant dense<0.000000e+00> : vector<8x128xf32>
    %17 = tpu.matmul %15, %16, %cst_12 {dimension_numbers = #tpu.dot_dimension_numbers<[1], [0], [0], [1], [0, 0, 1, 1], [], []>} : vector<8x128xbf16>, vector<128x128xbf16>, vector<8x128xf32> -> vector<8x128xf32>
    %c0_13 = arith.constant 0 : index
    %c0_14 = arith.constant 0 : index
    %18 = vector.load %arg5[%c0_13, %c0_14] : memref<1x128xf32, #tpu.memory_space<vmem>>, vector<1x128xf32>
    %19 = vector.broadcast %18 : vector<1x128xf32> to vector<8x128xf32>
    %20 = arith.addf %17, %19 : vector<8x128xf32>
    %c0_15 = arith.constant 0 : index
    %c0_16 = arith.constant 0 : index
    %21 = vector.load %arg7[%c0_15, %c0_16] : memref<8x128xf32, #tpu.memory_space<vmem>>, vector<8x128xf32>
    tpu.vector_store %arg7[%c0_15, %c0_16], %20 {strides = array<i32>} : memref<8x128xf32, #tpu.memory_space<vmem>>, vector<8x128xf32>,
    return
  }
  func.func @transform_0(%arg0: i32) -> (i32, i32) {
    %c0_i32 = arith.constant 0 : i32
    %c0_i32_0 = arith.constant 0 : i32
    return %arg0, %c0_i32 : i32, i32
  }
  func.func @transform_1(%arg0: i32) -> (i32, i32) {
    %c0_i32 = arith.constant 0 : i32
    %c0_i32_0 = arith.constant 0 : i32
    %c0_i32_1 = arith.constant 0 : i32
    return %c0_i32, %c0_i32_0 : i32, i32
  }
  func.func @transform_2(%arg0: i32) -> (i32, i32) {
    %c0_i32 = arith.constant 0 : i32
    %c0_i32_0 = arith.constant 0 : i32
    %c0_i32_1 = arith.constant 0 : i32
    return %c0_i32, %c0_i32_0 : i32, i32
  }
  func.func @transform_3(%arg0: i32) -> (i32, i32) {
    %c0_i32 = arith.constant 0 : i32
    %c0_i32_0 = arith.constant 0 : i32
    %c0_i32_1 = arith.constant 0 : i32
    return %c0_i32, %c0_i32_0 : i32, i32
  }
  func.func @transform_4(%arg0: i32) -> (i32, i32) {
    %c0_i32 = arith.constant 0 : i32
    %c0_i32_0 = arith.constant 0 : i32
    %c0_i32_1 = arith.constant 0 : i32
    return %c0_i32, %c0_i32_0 : i32, i32
  }
  func.func @transform_5(%arg0: i32) -> (i32, i32) {
    %c0_i32 = arith.constant 0 : i32
    %c0_i32_0 = arith.constant 0 : i32
    return %arg0, %c0_i32 : i32, i32
  }
  func.func @transform_6(%arg0: i32) -> (i32, i32) {
    %c0_i32 = arith.constant 0 : i32
    %c0_i32_0 = arith.constant 0 : i32
    return %arg0, %c0_i32 : i32, i32
  }
}

</mosaic_0001>

<llo_original>
// kernel: tpu_custom_call.1
$region0: #{tpu_custom_call.1}
  #allocation0 [shape = 'u32[]', space=smem, size = 0x4, offset = 0x4, fixed_abs, tag = 'smem constant byte address 0x4 - core index']
  #allocation1 [shape = 'u32[144,128]{1,0:T(1,128)}', space=vmem, size = 0x12000, scoped, tag = 'internal scratch']
  %s0 = inlined_call_operand.hbm [shape: bf16[8,1024], index: 0, kind: input, shape index: {}]
  %s1 = inlined_call_operand.hbm [shape: bf16[1024,128], index: 1, kind: input, shape index: {}]
  %s2 = inlined_call_operand.vmem [shape: f32[1,128], index: 2, kind: input, shape index: {}]
  %s3 = inlined_call_operand.hbm [shape: bf16[128,128], index: 3, kind: input, shape index: {}]
  %s4 = inlined_call_operand.vmem [shape: f32[1,128], index: 4, kind: input, shape index: {}]
  %s5 = inlined_call_operand.vmem [shape: u32[8,128], index: 5, kind: input, shape index: {}]
  %s6 = inlined_call_operand.hbm [shape: f32[8,128], index: 6, kind: output, shape index: {}]
  %s7 = sld [smem:[#allocation0]]
  $region46: #{tpu_custom_call.1} parent=0
    _
  %s9 = ssub.s32 1, %s7
  %s10 = scalar_select 0, %s9, %s7
  $region1: #{tpu_custom_call.1} parent=0
    #allocation2 [shape = 'u8[16384]{0}', space=vmem, size = 0x4000, scoped, tag = 'input window, operand 0, single buffered']
    #allocation3 [shape = 's32[1]{0}', space=sflag, size = 0x4, scoped, tag = 'scoped memory for tpu_custom_call.1']
    #allocation4 [shape = 's32[1]{0}', space=sflag, size = 0x4, scoped, tag = 'scoped memory for tpu_custom_call.1']
    #allocation5 [shape = 'u8[262144]{0}', space=vmem, size = 0x40000, scoped, tag = 'input window, operand 1, single buffered']
    #allocation6 [shape = 's32[1]{0}', space=sflag, size = 0x4, scoped, tag = 'scoped memory for tpu_custom_call.1']
    #allocation7 [shape = 'u8[32768]{0}', space=vmem, size = 0x8000, scoped, tag = 'input window, operand 3, single buffered']
    #allocation8 [shape = 'u8[4096]{0}', space=vmem, size = 0x1000, scoped, tag = 'output window, operand 0, single buffered']
    %11 = vsyncpa [#allocation3], 0
    %12 = vsyncpa [#allocation6], 0
    %13 = vsyncpa [#allocation4], 0
    // Predicated region
    $region2: #{tpu_custom_call.1} parent=1 // pred_check
      _
    $region3: #{tpu_custom_call.1} parent=1 // pred_check_branch
      %15 = sbr.rel (0) target = $region5
    $region4: #{tpu_custom_call.1} parent=1 // pred_region
      %s17 = ssub.s32 512, 512
      %18 = vsyncadd [#allocation3], %s17
      %s20 = sshll.u32 [#allocation2], 4
      %s21 = int_to_ptr.vmem [resolvable:$true] %s20
      %23 = dma.hbm_to_vmem [thread:$0]  %s0, 512, %s21, [#allocation3]
    $region5: #{tpu_custom_call.1} parent=1 // pred_fallthru
      _
    // Predicated region
    $region6: #{tpu_custom_call.1} parent=1 // pred_check
      _
    $region7: #{tpu_custom_call.1} parent=1 // pred_check_branch
      %25 = sbr.rel (0) target = $region9
    $region8: #{tpu_custom_call.1} parent=1 // pred_region
      %s27 = ssub.s32 8192, 8192
      %28 = vsyncadd [#allocation6], %s27
      %s29 = sshll.u32 [#allocation5], 4
      %s30 = int_to_ptr.vmem [resolvable:$true] %s29
      %35 = dma.hbm_to_vmem [thread:$0]  %s1, 8192, %s30, [#allocation6], 64, 64, 4
    $region9: #{tpu_custom_call.1} parent=1 // pred_fallthru
      _
    // Predicated region
    $region10: #{tpu_custom_call.1} parent=1 // pred_check
      _
    $region11: #{tpu_custom_call.1} parent=1 // pred_check_branch
      %37 = sbr.rel (0) target = $region13
    $region12: #{tpu_custom_call.1} parent=1 // pred_region
      _
    $region13: #{tpu_custom_call.1} parent=1 // pred_fallthru
      _
    // Predicated region
    $region14: #{tpu_custom_call.1} parent=1 // pred_check
      _
    $region15: #{tpu_custom_call.1} parent=1 // pred_check_branch
      %39 = sbr.rel (0) target = $region17
    $region16: #{tpu_custom_call.1} parent=1 // pred_region
      %s41 = ssub.s32 1024, 1024
      %42 = vsyncadd [#allocation6], %s41
      %s43 = sshll.u32 [#allocation7], 4
      %s44 = int_to_ptr.vmem [resolvable:$true] %s43
      %49 = dma.hbm_to_vmem [thread:$0]  %s3, 1024, %s44, [#allocation6], 64, 64, 4
    $region17: #{tpu_custom_call.1} parent=1 // pred_fallthru
      _
    // Predicated region
    $region18: #{tpu_custom_call.1} parent=1 // pred_check
      _
    $region19: #{tpu_custom_call.1} parent=1 // pred_check_branch
      %51 = sbr.rel (0) target = $region21
    $region20: #{tpu_custom_call.1} parent=1 // pred_region
      _
    $region21: #{tpu_custom_call.1} parent=1 // pred_fallthru
      _
    // Predicated region
    $region22: #{tpu_custom_call.1} parent=1 // pred_check
      _
    $region23: #{tpu_custom_call.1} parent=1 // pred_check_branch
      %53 = sbr.rel (0) target = $region25
    $region24: #{tpu_custom_call.1} parent=1 // pred_region
      _
    $region25: #{tpu_custom_call.1} parent=1 // pred_fallthru
      _
    // Predicated region
    $region26: #{tpu_custom_call.1} parent=1 // pred_check
      _
    $region27: #{tpu_custom_call.1} parent=1 // pred_check_branch
      %55 = sbr.rel (0) target = $region29
    $region28: #{tpu_custom_call.1} parent=1 // pred_region
      %56 = dma.done [#allocation3], 512
    $region29: #{tpu_custom_call.1} parent=1 // pred_fallthru
      _
    // Predicated region
    $region30: #{tpu_custom_call.1} parent=1 // pred_check
      _
    $region31: #{tpu_custom_call.1} parent=1 // pred_check_branch
      %58 = sbr.rel (0) target = $region33
    $region32: #{tpu_custom_call.1} parent=1 // pred_region
      %59 = dma.done [#allocation6], 8192
    $region33: #{tpu_custom_call.1} parent=1 // pred_fallthru
      _
    // Predicated region
    $region34: #{tpu_custom_call.1} parent=1 // pred_check
      _
    $region35: #{tpu_custom_call.1} parent=1 // pred_check_branch
      %61 = sbr.rel (0) target = $region37
    $region36: #{tpu_custom_call.1} parent=1 // pred_region
      %62 = dma.done [#allocation6], 1024
    $region37: #{tpu_custom_call.1} parent=1 // pred_fallthru
      _
    %v64 = vld [vmem:[#allocation2] sm:$0xff]
    %v65 = vld [vmem:[#allocation2 + $0x8] sm:$0xff]
    %v66 = vld [vmem:[#allocation2 + $0x10] sm:$0xff]
    %v67 = vld [vmem:[#allocation2 + $0x18] sm:$0xff]
    %v68 = vld [vmem:[#allocation5] sm:$0xf]
    %v69 = vld [vmem:[#allocation5 + $0x4] sm:$0xf]
    %v70 = vld [vmem:[#allocation5 + $0x8] sm:$0xf]
    %v71 = vld [vmem:[#allocation5 + $0xc] sm:$0xf]
    %v72 = vld [vmem:[#allocation5 + $0x10] sm:$0xf]
    %v73 = vld [vmem:[#allocation5 + $0x14] sm:$0xf]
    %v74 = vld [vmem:[#allocation5 + $0x18] sm:$0xf]
    %v75 = vld [vmem:[#allocation5 + $0x1c] sm:$0xf]
    %v76 = vld [vmem:[#allocation5 + $0x20] sm:$0xf]
    %v77 = vld [vmem:[#allocation5 + $0x24] sm:$0xf]
    %v78 = vld [vmem:[#allocation5 + $0x28] sm:$0xf]
    %v79 = vld [vmem:[#allocation5 + $0x2c] sm:$0xf]
    %v80 = vld [vmem:[#allocation5 + $0x30] sm:$0xf]
    %v81 = vld [vmem:[#allocation5 + $0x34] sm:$0xf]
    %v82 = vld [vmem:[#allocation5 + $0x38] sm:$0xf]
    %v83 = vld [vmem:[#allocation5 + $0x3c] sm:$0xf]
    %v84 = vld [vmem:[#allocation5 + $0x40] sm:$0xf]
    %v85 = vld [vmem:[#allocation5 + $0x44] sm:$0xf]
    %v86 = vld [vmem:[#allocation5 + $0x48] sm:$0xf]
    %v87 = vld [vmem:[#allocation5 + $0x4c] sm:$0xf]
    %v88 = vld [vmem:[#allocation5 + $0x50] sm:$0xf]
    %v89 = vld [vmem:[#allocation5 + $0x54] sm:$0xf]
    %v90 = vld [vmem:[#allocation5 + $0x58] sm:$0xf]
    %v91 = vld [vmem:[#allocation5 + $0x5c] sm:$0xf]
    %v92 = vld [vmem:[#allocation5 + $0x60] sm:$0xf]
    %v93 = vld [vmem:[#allocation5 + $0x64] sm:$0xf]
    %v94 = vld [vmem:[#allocation5 + $0x68] sm:$0xf]
    %v95 = vld [vmem:[#allocation5 + $0x6c] sm:$0xf]
    %v96 = vld [vmem:[#allocation5 + $0x70] sm:$0xf]
    %v97 = vld [vmem:[#allocation5 + $0x74] sm:$0xf]
    %v98 = vld [vmem:[#allocation5 + $0x78] sm:$0xf]
    %v99 = vld [vmem:[#allocation5 + $0x7c] sm:$0xf]
    %v100 = vld [vmem:[#allocation5 + $0x80] sm:$0xf]
    %v101 = vld [vmem:[#allocation5 + $0x84] sm:$0xf]
    %v102 = vld [vmem:[#allocation5 + $0x88] sm:$0xf]
    %v103 = vld [vmem:[#allocation5 + $0x8c] sm:$0xf]
    %v104 = vld [vmem:[#allocation5 + $0x90] sm:$0xf]
    %v105 = vld [vmem:[#allocation5 + $0x94] sm:$0xf]
    %v106 = vld [vmem:[#allocation5 + $0x98] sm:$0xf]
    %v107 = vld [vmem:[#allocation5 + $0x9c] sm:$0xf]
    %v108 = vld [vmem:[#allocation5 + $0xa0] sm:$0xf]
    %v109 = vld [vmem:[#allocation5 + $0xa4] sm:$0xf]
    %v110 = vld [vmem:[#allocation5 + $0xa8] sm:$0xf]
    %v111 = vld [vmem:[#allocation5 + $0xac] sm:$0xf]
    %v112 = vld [vmem:[#allocation5 + $0xb0] sm:$0xf]
    %v113 = vld [vmem:[#allocation5 + $0xb4] sm:$0xf]
    %v114 = vld [vmem:[#allocation5 + $0xb8] sm:$0xf]
    %v115 = vld [vmem:[#allocation5 + $0xbc] sm:$0xf]
    %v116 = vld [vmem:[#allocation5 + $0xc0] sm:$0xf]
    %v117 = vld [vmem:[#allocation5 + $0xc4] sm:$0xf]
    %v118 = vld [vmem:[#allocation5 + $0xc8] sm:$0xf]
    %v119 = vld [vmem:[#allocation5 + $0xcc] sm:$0xf]
    %v120 = vld [vmem:[#allocation5 + $0xd0] sm:$0xf]
    %v121 = vld [vmem:[#allocation5 + $0xd4] sm:$0xf]
    %v122 = vld [vmem:[#allocation5 + $0xd8] sm:$0xf]
    %v123 = vld [vmem:[#allocation5 + $0xdc] sm:$0xf]
    %v124 = vld [vmem:[#allocation5 + $0xe0] sm:$0xf]
    %v125 = vld [vmem:[#allocation5 + $0xe4] sm:$0xf]
    %v126 = vld [vmem:[#allocation5 + $0xe8] sm:$0xf]
    %v127 = vld [vmem:[#allocation5 + $0xec] sm:$0xf]
    %v128 = vld [vmem:[#allocation5 + $0xf0] sm:$0xf]
    %v129 = vld [vmem:[#allocation5 + $0xf4] sm:$0xf]
    %v130 = vld [vmem:[#allocation5 + $0xf8] sm:$0xf]
    %v131 = vld [vmem:[#allocation5 + $0xfc] sm:$0xf]
    %v132 = vld [vmem:[#allocation5 + $0x100] sm:$0xf]
    %v133 = vld [vmem:[#allocation5 + $0x104] sm:$0xf]
    %v134 = vld [vmem:[#allocation5 + $0x108] sm:$0xf]
    %v135 = vld [vmem:[#allocation5 + $0x10c] sm:$0xf]
    %v136 = vld [vmem:[#allocation5 + $0x110] sm:$0xf]
    %v137 = vld [vmem:[#allocation5 + $0x114] sm:$0xf]
    %v138 = vld [vmem:[#allocation5 + $0x118] sm:$0xf]
    %v139 = vld [vmem:[#allocation5 + $0x11c] sm:$0xf]
    %v140 = vld [vmem:[#allocation5 + $0x120] sm:$0xf]
    %v141 = vld [vmem:[#allocation5 + $0x124] sm:$0xf]
    %v142 = vld [vmem:[#allocation5 + $0x128] sm:$0xf]
    %v143 = vld [vmem:[#allocation5 + $0x12c] sm:$0xf]
    %v144 = vld [vmem:[#allocation5 + $0x130] sm:$0xf]
    %v145 = vld [vmem:[#allocation5 + $0x134] sm:$0xf]
    %v146 = vld [vmem:[#allocation5 + $0x138] sm:$0xf]
    %v147 = vld [vmem:[#allocation5 + $0x13c] sm:$0xf]
    %v148 = vld [vmem:[#allocation5 + $0x140] sm:$0xf]
    %v149 = vld [vmem:[#allocation5 + $0x144] sm:$0xf]
    %v150 = vld [vmem:[#allocation5 + $0x148] sm:$0xf]
    %v151 = vld [vmem:[#allocation5 + $0x14c] sm:$0xf]
    %v152 = vld [vmem:[#allocation5 + $0x150] sm:$0xf]
    %v153 = vld [vmem:[#allocation5 + $0x154] sm:$0xf]
    %v154 = vld [vmem:[#allocation5 + $0x158] sm:$0xf]
    %v155 = vld [vmem:[#allocation5 + $0x15c] sm:$0xf]
    %v156 = vld [vmem:[#allocation5 + $0x160] sm:$0xf]
    %v157 = vld [vmem:[#allocation5 + $0x164] sm:$0xf]
    %v158 = vld [vmem:[#allocation5 + $0x168] sm:$0xf]
    %v159 = vld [vmem:[#allocation5 + $0x16c] sm:$0xf]
    %v160 = vld [vmem:[#allocation5 + $0x170] sm:$0xf]
    %v161 = vld [vmem:[#allocation5 + $0x174] sm:$0xf]
    %v162 = vld [vmem:[#allocation5 + $0x178] sm:$0xf]
    %v163 = vld [vmem:[#allocation5 + $0x17c] sm:$0xf]
    %v164 = vld [vmem:[#allocation5 + $0x180] sm:$0xf]
    %v165 = vld [vmem:[#allocation5 + $0x184] sm:$0xf]
    %v166 = vld [vmem:[#allocation5 + $0x188] sm:$0xf]
    %v167 = vld [vmem:[#allocation5 + $0x18c] sm:$0xf]
    %v168 = vld [vmem:[#allocation5 + $0x190] sm:$0xf]
    %v169 = vld [vmem:[#allocation5 + $0x194] sm:$0xf]
    %v170 = vld [vmem:[#allocation5 + $0x198] sm:$0xf]
    %v171 = vld [vmem:[#allocation5 + $0x19c] sm:$0xf]
    %v172 = vld [vmem:[#allocation5 + $0x1a0] sm:$0xf]
    %v173 = vld [vmem:[#allocation5 + $0x1a4] sm:$0xf]
    %v174 = vld [vmem:[#allocation5 + $0x1a8] sm:$0xf]
    %v175 = vld [vmem:[#allocation5 + $0x1ac] sm:$0xf]
    %v176 = vld [vmem:[#allocation5 + $0x1b0] sm:$0xf]
    %v177 = vld [vmem:[#allocation5 + $0x1b4] sm:$0xf]
    %v178 = vld [vmem:[#allocation5 + $0x1b8] sm:$0xf]
    %v179 = vld [vmem:[#allocation5 + $0x1bc] sm:$0xf]
    %v180 = vld [vmem:[#allocation5 + $0x1c0] sm:$0xf]
    %v181 = vld [vmem:[#allocation5 + $0x1c4] sm:$0xf]
    %v182 = vld [vmem:[#allocation5 + $0x1c8] sm:$0xf]
    %v183 = vld [vmem:[#allocation5 + $0x1cc] sm:$0xf]
    %v184 = vld [vmem:[#allocation5 + $0x1d0] sm:$0xf]
    %v185 = vld [vmem:[#allocation5 + $0x1d4] sm:$0xf]
    %v186 = vld [vmem:[#allocation5 + $0x1d8] sm:$0xf]
    %v187 = vld [vmem:[#allocation5 + $0x1dc] sm:$0xf]
    %v188 = vld [vmem:[#allocation5 + $0x1e0] sm:$0xf]
    %v189 = vld [vmem:[#allocation5 + $0x1e4] sm:$0xf]
    %v190 = vld [vmem:[#allocation5 + $0x1e8] sm:$0xf]
    %v191 = vld [vmem:[#allocation5 + $0x1ec] sm:$0xf]
    %v192 = vld [vmem:[#allocation5 + $0x1f0] sm:$0xf]
    %v193 = vld [vmem:[#allocation5 + $0x1f4] sm:$0xf]
    %v194 = vld [vmem:[#allocation5 + $0x1f8] sm:$0xf]
    %v195 = vld [vmem:[#allocation5 + $0x1fc] sm:$0xf]
    %v196 = vld [vmem:[%s2] sm:$0x1]
    %v198 = vlaneseq
    %v199 = vshrl.u32 %v198, 7
    %v200 = vsub.s32 0, %v199
    %v201 = vrot.slane %v196, %v200
    %v207 = vunpack.c.l.b16 %v64
    %v208 = vunpack.c.h.b16 %v64
    %v209 = vunpack.c.l.b16 %v65
    %v210 = vunpack.c.h.b16 %v65
    %v211 = vunpack.c.l.b16 %v66
    %v212 = vunpack.c.h.b16 %v66
    %v213 = vunpack.c.l.b16 %v67
    %v214 = vunpack.c.h.b16 %v67
    %v215 = vpack.c.b16 %v207, %v207
    %v216 = vpack.c.b16 %v208, %v208
    %v217 = vpack.c.b16 %v209, %v209
    %v218 = vpack.c.b16 %v210, %v210
    %v219 = vpack.c.b16 %v211, %v211
    %v220 = vpack.c.b16 %v212, %v212
    %v221 = vpack.c.b16 %v213, %v213
    %v222 = vpack.c.b16 %v214, %v214
    %v359 = vunpack.c.l.b16 %v68
    %v360 = vunpack.c.l.b16 %v69
    %v361 = vunpack.c.l.b16 %v70
    %v362 = vunpack.c.l.b16 %v71
    %v363 = vunpack.c.l.b16 %v72
    %v364 = vunpack.c.l.b16 %v73
    %v365 = vunpack.c.l.b16 %v74
    %v366 = vunpack.c.l.b16 %v75
    %v367 = vunpack.c.l.b16 %v76
    %v368 = vunpack.c.l.b16 %v77
    %v369 = vunpack.c.l.b16 %v78
    %v370 = vunpack.c.l.b16 %v79
    %v371 = vunpack.c.l.b16 %v80
    %v372 = vunpack.c.l.b16 %v81
    %v373 = vunpack.c.l.b16 %v82
    %v374 = vunpack.c.l.b16 %v83
    %v375 = vunpack.c.l.b16 %v84
    %v376 = vunpack.c.l.b16 %v85
    %v377 = vunpack.c.l.b16 %v86
    %v378 = vunpack.c.l.b16 %v87
    %v379 = vunpack.c.l.b16 %v88
    %v380 = vunpack.c.l.b16 %v89
    %v381 = vunpack.c.l.b16 %v90
    %v382 = vunpack.c.l.b16 %v91
    %v383 = vunpack.c.l.b16 %v92
    %v384 = vunpack.c.l.b16 %v93
    %v385 = vunpack.c.l.b16 %v94
    %v386 = vunpack.c.l.b16 %v95
    %v387 = vunpack.c.l.b16 %v96
    %v388 = vunpack.c.l.b16 %v97
    %v389 = vunpack.c.l.b16 %v98
    %v390 = vunpack.c.l.b16 %v99
    %v391 = vunpack.c.l.b16 %v100
    %v392 = vunpack.c.l.b16 %v101
    %v393 = vunpack.c.l.b16 %v102
    %v394 = vunpack.c.l.b16 %v103
    %v395 = vunpack.c.l.b16 %v104
    %v396 = vunpack.c.l.b16 %v105
    %v397 = vunpack.c.l.b16 %v106
    %v398 = vunpack.c.l.b16 %v107
    %v399 = vunpack.c.l.b16 %v108
    %v400 = vunpack.c.l.b16 %v109
    %v401 = vunpack.c.l.b16 %v110
    %v402 = vunpack.c.l.b16 %v111
    %v403 = vunpack.c.l.b16 %v112
    %v404 = vunpack.c.l.b16 %v113
    %v405 = vunpack.c.l.b16 %v114
    %v406 = vunpack.c.l.b16 %v115
    %v407 = vunpack.c.l.b16 %v116
    %v408 = vunpack.c.l.b16 %v117
    %v409 = vunpack.c.l.b16 %v118
    %v410 = vunpack.c.l.b16 %v119
    %v411 = vunpack.c.l.b16 %v120
    %v412 = vunpack.c.l.b16 %v121
    %v413 = vunpack.c.l.b16 %v122
    %v414 = vunpack.c.l.b16 %v123
    %v415 = vunpack.c.l.b16 %v124
    %v416 = vunpack.c.l.b16 %v125
    %v417 = vunpack.c.l.b16 %v126
    %v418 = vunpack.c.l.b16 %v127
    %v419 = vunpack.c.l.b16 %v128
    %v420 = vunpack.c.l.b16 %v129
    %v421 = vunpack.c.l.b16 %v130
    %v422 = vunpack.c.l.b16 %v131
    %v423 = vunpack.c.l.b16 %v132
    %v424 = vunpack.c.l.b16 %v133
    %v425 = vunpack.c.l.b16 %v134
    %v426 = vunpack.c.l.b16 %v135
    %v427 = vunpack.c.l.b16 %v136
    %v428 = vunpack.c.l.b16 %v137
    %v429 = vunpack.c.l.b16 %v138
    %v430 = vunpack.c.l.b16 %v139
    %v431 = vunpack.c.l.b16 %v140
    %v432 = vunpack.c.l.b16 %v141
    %v433 = vunpack.c.l.b16 %v142
    %v434 = vunpack.c.l.b16 %v143
    %v435 = vunpack.c.l.b16 %v144
    %v436 = vunpack.c.l.b16 %v145
    %v437 = vunpack.c.l.b16 %v146
    %v438 = vunpack.c.l.b16 %v147
    %v439 = vunpack.c.l.b16 %v148
    %v440 = vunpack.c.l.b16 %v149
    %v441 = vunpack.c.l.b16 %v150
    %v442 = vunpack.c.l.b16 %v151
    %v443 = vunpack.c.l.b16 %v152
    %v444 = vunpack.c.l.b16 %v153
    %v445 = vunpack.c.l.b16 %v154
    %v446 = vunpack.c.l.b16 %v155
    %v447 = vunpack.c.l.b16 %v156
    %v448 = vunpack.c.l.b16 %v157
    %v449 = vunpack.c.l.b16 %v158
    %v450 = vunpack.c.l.b16 %v159
    %v451 = vunpack.c.l.b16 %v160
    %v452 = vunpack.c.l.b16 %v161
    %v453 = vunpack.c.l.b16 %v162
    %v454 = vunpack.c.l.b16 %v163
    %v455 = vunpack.c.l.b16 %v164
    %v456 = vunpack.c.l.b16 %v165
    %v457 = vunpack.c.l.b16 %v166
    %v458 = vunpack.c.l.b16 %v167
    %v459 = vunpack.c.l.b16 %v168
    %v460 = vunpack.c.l.b16 %v169
    %v461 = vunpack.c.l.b16 %v170
    %v462 = vunpack.c.l.b16 %v171
    %v463 = vunpack.c.l.b16 %v172
    %v464 = vunpack.c.l.b16 %v173
    %v465 = vunpack.c.l.b16 %v174
    %v466 = vunpack.c.l.b16 %v175
    %v467 = vunpack.c.l.b16 %v176
    %v468 = vunpack.c.l.b16 %v177
    %v469 = vunpack.c.l.b16 %v178
    %v470 = vunpack.c.l.b16 %v179
    %v471 = vunpack.c.l.b16 %v180
    %v472 = vunpack.c.l.b16 %v181
    %v473 = vunpack.c.l.b16 %v182
    %v474 = vunpack.c.l.b16 %v183
    %v475 = vunpack.c.l.b16 %v184
    %v476 = vunpack.c.l.b16 %v185
    %v477 = vunpack.c.l.b16 %v186
    %v478 = vunpack.c.l.b16 %v187
    %v479 = vunpack.c.l.b16 %v188
    %v480 = vunpack.c.l.b16 %v189
    %v481 = vunpack.c.l.b16 %v190
    %v482 = vunpack.c.l.b16 %v191
    %v483 = vunpack.c.l.b16 %v192
    %v484 = vunpack.c.l.b16 %v193
    %v485 = vunpack.c.l.b16 %v194
    %v486 = vunpack.c.l.b16 %v195
    %v487 = vpack.c.b16 %v360, %v359
    %v488 = vpack.c.b16 %v362, %v361
    %v489 = vpack.c.b16 %v364, %v363
    %v490 = vpack.c.b16 %v366, %v365
    %v491 = vpack.c.b16 %v368, %v367
    %v492 = vpack.c.b16 %v370, %v369
    %v493 = vpack.c.b16 %v372, %v371
    %v494 = vpack.c.b16 %v374, %v373
    %v495 = vpack.c.b16 %v376, %v375
    %v496 = vpack.c.b16 %v378, %v377
    %v497 = vpack.c.b16 %v380, %v379
    %v498 = vpack.c.b16 %v382, %v381
    %v499 = vpack.c.b16 %v384, %v383
    %v500 = vpack.c.b16 %v386, %v385
    %v501 = vpack.c.b16 %v388, %v387
    %v502 = vpack.c.b16 %v390, %v389
    %v503 = vpack.c.b16 %v392, %v391
    %v504 = vpack.c.b16 %v394, %v393
    %v505 = vpack.c.b16 %v396, %v395
    %v506 = vpack.c.b16 %v398, %v397
    %v507 = vpack.c.b16 %v400, %v399
    %v508 = vpack.c.b16 %v402, %v401
    %v509 = vpack.c.b16 %v404, %v403
    %v510 = vpack.c.b16 %v406, %v405
    %v511 = vpack.c.b16 %v408, %v407
    %v512 = vpack.c.b16 %v410, %v409
    %v513 = vpack.c.b16 %v412, %v411
    %v514 = vpack.c.b16 %v414, %v413
    %v515 = vpack.c.b16 %v416, %v415
    %v516 = vpack.c.b16 %v418, %v417
    %v517 = vpack.c.b16 %v420, %v419
    %v518 = vpack.c.b16 %v422, %v421
    %v519 = vpack.c.b16 %v424, %v423
    %v520 = vpack.c.b16 %v426, %v425
    %v521 = vpack.c.b16 %v428, %v427
    %v522 = vpack.c.b16 %v430, %v429
    %v523 = vpack.c.b16 %v432, %v431
    %v524 = vpack.c.b16 %v434, %v433
    %v525 = vpack.c.b16 %v436, %v435
    %v526 = vpack.c.b16 %v438, %v437
    %v527 = vpack.c.b16 %v440, %v439
    %v528 = vpack.c.b16 %v442, %v441
    %v529 = vpack.c.b16 %v444, %v443
    %v530 = vpack.c.b16 %v446, %v445
    %v531 = vpack.c.b16 %v448, %v447
    %v532 = vpack.c.b16 %v450, %v449
    %v533 = vpack.c.b16 %v452, %v451
    %v534 = vpack.c.b16 %v454, %v453
    %v535 = vpack.c.b16 %v456, %v455
    %v536 = vpack.c.b16 %v458, %v457
    %v537 = vpack.c.b16 %v460, %v459
    %v538 = vpack.c.b16 %v462, %v461
    %v539 = vpack.c.b16 %v464, %v463
    %v540 = vpack.c.b16 %v466, %v465
    %v541 = vpack.c.b16 %v468, %v467
    %v542 = vpack.c.b16 %v470, %v469
    %v543 = vpack.c.b16 %v472, %v471
    %v544 = vpack.c.b16 %v474, %v473
    %v545 = vpack.c.b16 %v476, %v475
    %v546 = vpack.c.b16 %v478, %v477
    %v547 = vpack.c.b16 %v480, %v479
    %v548 = vpack.c.b16 %v482, %v481
    %v549 = vpack.c.b16 %v484, %v483
    %v550 = vpack.c.b16 %v486, %v485
    %615 = vmatprep.subr.bf16.mxu0 0
    %616 = vmatpush1.bf16.msra.mxu0 %v487
    %617 = vmatprep.subr.bf16.mxu0 0
    %618 = vmatpush1.bf16.msra.mxu0 %v488
    %619 = vmatprep.subr.bf16.mxu0 0
    %620 = vmatpush1.bf16.msra.mxu0 %v489
    %621 = vmatprep.subr.bf16.mxu0 0
    %622 = vmatpush1.bf16.msra.mxu0 %v490
    %623 = vmatprep.subr.bf16.mxu0 0
    %624 = vmatpush1.bf16.msra.mxu0 %v491
    %625 = vmatprep.subr.bf16.mxu0 0
    %626 = vmatpush1.bf16.msra.mxu0 %v492
    %627 = vmatprep.subr.bf16.mxu0 0
    %628 = vmatpush1.bf16.msra.mxu0 %v493
    %629 = vmatprep.subr.bf16.mxu0 0
    %630 = vmatpush1.bf16.msra.mxu0 %v494
    %631 = vmatprep.subr.bf16.mxu0 0
    %632 = vmatpush1.bf16.msra.mxu0 %v495
    %633 = vmatprep.subr.bf16.mxu0 0
    %634 = vmatpush1.bf16.msra.mxu0 %v496
    %635 = vmatprep.subr.bf16.mxu0 0
    %636 = vmatpush1.bf16.msra.mxu0 %v497
    %637 = vmatprep.subr.bf16.mxu0 0
    %638 = vmatpush1.bf16.msra.mxu0 %v498
    %639 = vmatprep.subr.bf16.mxu0 0
    %640 = vmatpush1.bf16.msra.mxu0 %v499
    %641 = vmatprep.subr.bf16.mxu0 0
    %642 = vmatpush1.bf16.msra.mxu0 %v500
    %643 = vmatprep.subr.bf16.mxu0 0
    %644 = vmatpush1.bf16.msra.mxu0 %v501
    %645 = vmatprep.subr.bf16.mxu0 0
    %646 = vmatpush1.bf16.msra.mxu0 %v502
    %647 = vmatprep.mubr.bf16.mxu0 %v216
    %648 = vmatmul.mubr.bf16.gmra.mrb[0].mxu0 %v215
    %v649 = vpop.f32.mrb[0].mxu0
    %v650 = vadd.f32 %v201, %v649
    %v651 = vpop.f32.mrb[0].mxu0
    %v652 = vpop.f32.mrb[0].mxu0
    %v653 = vpop.f32.mrb[0].mxu0
    %654 = vdwg.mxu0
    %655 = vmatprep.subr.bf16.mxu0 0
    %656 = vmatpush1.bf16.msra.mxu0 %v503
    %657 = vmatprep.subr.bf16.mxu0 0
    %658 = vmatpush1.bf16.msra.mxu0 %v504
    %659 = vmatprep.subr.bf16.mxu0 0
    %660 = vmatpush1.bf16.msra.mxu0 %v505
    %661 = vmatprep.subr.bf16.mxu0 0
    %662 = vmatpush1.bf16.msra.mxu0 %v506
    %663 = vmatprep.subr.bf16.mxu0 0
    %664 = vmatpush1.bf16.msra.mxu0 %v507
    %665 = vmatprep.subr.bf16.mxu0 0
    %666 = vmatpush1.bf16.msra.mxu0 %v508
    %667 = vmatprep.subr.bf16.mxu0 0
    %668 = vmatpush1.bf16.msra.mxu0 %v509
    %669 = vmatprep.subr.bf16.mxu0 0
    %670 = vmatpush1.bf16.msra.mxu0 %v510
    %671 = vmatprep.subr.bf16.mxu0 0
    %672 = vmatpush1.bf16.msra.mxu0 %v511
    %673 = vmatprep.subr.bf16.mxu0 0
    %674 = vmatpush1.bf16.msra.mxu0 %v512
    %675 = vmatprep.subr.bf16.mxu0 0
    %676 = vmatpush1.bf16.msra.mxu0 %v513
    %677 = vmatprep.subr.bf16.mxu0 0
    %678 = vmatpush1.bf16.msra.mxu0 %v514
    %679 = vmatprep.subr.bf16.mxu0 0
    %680 = vmatpush1.bf16.msra.mxu0 %v515
    %681 = vmatprep.subr.bf16.mxu0 0
    %682 = vmatpush1.bf16.msra.mxu0 %v516
    %683 = vmatprep.subr.bf16.mxu0 0
    %684 = vmatpush1.bf16.msra.mxu0 %v517
    %685 = vmatprep.subr.bf16.mxu0 0
    %686 = vmatpush1.bf16.msra.mxu0 %v518
    %687 = vmatprep.mubr.bf16.mxu0 %v218
    %688 = vmatmul.mubr.bf16.gmra.mrb[0].mxu0 %v217
    %v689 = vpop.f32.mrb[0].mxu0
    %v690 = vadd.f32 %v650, %v689
    %v691 = vpop.f32.mrb[0].mxu0
    %v692 = vpop.f32.mrb[0].mxu0
    %v693 = vpop.f32.mrb[0].mxu0
    %694 = vdwg.mxu0
    %695 = vmatprep.subr.bf16.mxu0 0
    %696 = vmatpush1.bf16.msra.mxu0 %v519
    %697 = vmatprep.subr.bf16.mxu0 0
    %698 = vmatpush1.bf16.msra.mxu0 %v520
    %699 = vmatprep.subr.bf16.mxu0 0
    %700 = vmatpush1.bf16.msra.mxu0 %v521
    %701 = vmatprep.subr.bf16.mxu0 0
    %702 = vmatpush1.bf16.msra.mxu0 %v522
    %703 = vmatprep.subr.bf16.mxu0 0
    %704 = vmatpush1.bf16.msra.mxu0 %v523
    %705 = vmatprep.subr.bf16.mxu0 0
    %706 = vmatpush1.bf16.msra.mxu0 %v524
    %707 = vmatprep.subr.bf16.mxu0 0
    %708 = vmatpush1.bf16.msra.mxu0 %v525
    %709 = vmatprep.subr.bf16.mxu0 0
    %710 = vmatpush1.bf16.msra.mxu0 %v526
    %711 = vmatprep.subr.bf16.mxu0 0
    %712 = vmatpush1.bf16.msra.mxu0 %v527
    %713 = vmatprep.subr.bf16.mxu0 0
    %714 = vmatpush1.bf16.msra.mxu0 %v528
    %715 = vmatprep.subr.bf16.mxu0 0
    %716 = vmatpush1.bf16.msra.mxu0 %v529
    %717 = vmatprep.subr.bf16.mxu0 0
    %718 = vmatpush1.bf16.msra.mxu0 %v530
    %719 = vmatprep.subr.bf16.mxu0 0
    %720 = vmatpush1.bf16.msra.mxu0 %v531
    %721 = vmatprep.subr.bf16.mxu0 0
    %722 = vmatpush1.bf16.msra.mxu0 %v532
    %723 = vmatprep.subr.bf16.mxu0 0
    %724 = vmatpush1.bf16.msra.mxu0 %v533
    %725 = vmatprep.subr.bf16.mxu0 0
    %726 = vmatpush1.bf16.msra.mxu0 %v534
    %727 = vmatprep.mubr.bf16.mxu0 %v220
    %728 = vmatmul.mubr.bf16.gmra.mrb[0].mxu0 %v219
    %v729 = vpop.f32.mrb[0].mxu0
    %v730 = vadd.f32 %v690, %v729
    %v731 = vpop.f32.mrb[0].mxu0
    %v732 = vpop.f32.mrb[0].mxu0
    %v733 = vpop.f32.mrb[0].mxu0
    %734 = vdwg.mxu0
    %735 = vmatprep.subr.bf16.mxu0 0
    %736 = vmatpush1.bf16.msra.mxu0 %v535
    %737 = vmatprep.subr.bf16.mxu0 0
    %738 = vmatpush1.bf16.msra.mxu0 %v536
    %739 = vmatprep.subr.bf16.mxu0 0
    %740 = vmatpush1.bf16.msra.mxu0 %v537
    %741 = vmatprep.subr.bf16.mxu0 0
    %742 = vmatpush1.bf16.msra.mxu0 %v538
    %743 = vmatprep.subr.bf16.mxu0 0
    %744 = vmatpush1.bf16.msra.mxu0 %v539
    %745 = vmatprep.subr.bf16.mxu0 0
    %746 = vmatpush1.bf16.msra.mxu0 %v540
    %747 = vmatprep.subr.bf16.mxu0 0
    %748 = vmatpush1.bf16.msra.mxu0 %v541
    %749 = vmatprep.subr.bf16.mxu0 0
    %750 = vmatpush1.bf16.msra.mxu0 %v542
    %751 = vmatprep.subr.bf16.mxu0 0
    %752 = vmatpush1.bf16.msra.mxu0 %v543
    %753 = vmatprep.subr.bf16.mxu0 0
    %754 = vmatpush1.bf16.msra.mxu0 %v544
    %755 = vmatprep.subr.bf16.mxu0 0
    %756 = vmatpush1.bf16.msra.mxu0 %v545
    %757 = vmatprep.subr.bf16.mxu0 0
    %758 = vmatpush1.bf16.msra.mxu0 %v546
    %759 = vmatprep.subr.bf16.mxu0 0
    %760 = vmatpush1.bf16.msra.mxu0 %v547
    %761 = vmatprep.subr.bf16.mxu0 0
    %762 = vmatpush1.bf16.msra.mxu0 %v548
    %763 = vmatprep.subr.bf16.mxu0 0
    %764 = vmatpush1.bf16.msra.mxu0 %v549
    %765 = vmatprep.subr.bf16.mxu0 0
    %766 = vmatpush1.bf16.msra.mxu0 %v550
    %767 = vmatprep.mubr.bf16.mxu0 %v222
    %768 = vmatmul.mubr.bf16.gmra.mrb[0].mxu0 %v221
    %v769 = vpop.f32.mrb[0].mxu0
    %v770 = vadd.f32 %v730, %v769
    %v771 = vpop.f32.mrb[0].mxu0
    %v772 = vpop.f32.mrb[0].mxu0
    %v773 = vpop.f32.mrb[0].mxu0
    %774 = vdwg.mxu0
    %v775 = vmax.f32 %v770, 0.0
    %v776 = vld [vmem:[%s5] sm:$0xff]
    %vm777 = vcmp.ge.u32.totalorder %v776, 858993459
    %v778 = vsel %vm777, %v775, 0.0
    %v779 = vmul.f32 %v778, 1.25
    %v780 = vpack.c.bf16 %v779, %v779
    %v781 = vld [vmem:[#allocation7] sm:$0xf]
    %v782 = vld [vmem:[#allocation7 + $0x4] sm:$0xf]
    %v783 = vld [vmem:[#allocation7 + $0x8] sm:$0xf]
    %v784 = vld [vmem:[#allocation7 + $0xc] sm:$0xf]
    %v785 = vld [vmem:[#allocation7 + $0x10] sm:$0xf]
    %v786 = vld [vmem:[#allocation7 + $0x14] sm:$0xf]
    %v787 = vld [vmem:[#allocation7 + $0x18] sm:$0xf]
    %v788 = vld [vmem:[#allocation7 + $0x1c] sm:$0xf]
    %v789 = vld [vmem:[#allocation7 + $0x20] sm:$0xf]
    %v790 = vld [vmem:[#allocation7 + $0x24] sm:$0xf]
    %v791 = vld [vmem:[#allocation7 + $0x28] sm:$0xf]
    %v792 = vld [vmem:[#allocation7 + $0x2c] sm:$0xf]
    %v793 = vld [vmem:[#allocation7 + $0x30] sm:$0xf]
    %v794 = vld [vmem:[#allocation7 + $0x34] sm:$0xf]
    %v795 = vld [vmem:[#allocation7 + $0x38] sm:$0xf]
    %v796 = vld [vmem:[#allocation7 + $0x3c] sm:$0xf]
    %v797 = vld [vmem:[%s4] sm:$0x1]
    %v799 = vlaneseq
    %v800 = vshrl.u32 %v799, 7
    %v801 = vsub.s32 0, %v800
    %v802 = vrot.slane %v797, %v801
    %v820 = vunpack.c.l.b16 %v781
    %v821 = vunpack.c.l.b16 %v782
    %v822 = vunpack.c.l.b16 %v783
    %v823 = vunpack.c.l.b16 %v784
    %v824 = vunpack.c.l.b16 %v785
    %v825 = vunpack.c.l.b16 %v786
    %v826 = vunpack.c.l.b16 %v787
    %v827 = vunpack.c.l.b16 %v788
    %v828 = vunpack.c.l.b16 %v789
    %v829 = vunpack.c.l.b16 %v790
    %v830 = vunpack.c.l.b16 %v791
    %v831 = vunpack.c.l.b16 %v792
    %v832 = vunpack.c.l.b16 %v793
    %v833 = vunpack.c.l.b16 %v794
    %v834 = vunpack.c.l.b16 %v795
    %v835 = vunpack.c.l.b16 %v796
    %v836 = vpack.c.b16 %v821, %v820
    %v837 = vpack.c.b16 %v823, %v822
    %v838 = vpack.c.b16 %v825, %v824
    %v839 = vpack.c.b16 %v827, %v826
    %v840 = vpack.c.b16 %v829, %v828
    %v841 = vpack.c.b16 %v831, %v830
    %v842 = vpack.c.b16 %v833, %v832
    %v843 = vpack.c.b16 %v835, %v834
    %852 = vmatprep.subr.bf16.mxu0 0
    %853 = vmatpush1.bf16.msra.mxu0 %v836
    %854 = vmatprep.subr.bf16.mxu0 0
    %855 = vmatpush1.bf16.msra.mxu0 %v837
    %856 = vmatprep.subr.bf16.mxu0 0
    %857 = vmatpush1.bf16.msra.mxu0 %v838
    %858 = vmatprep.subr.bf16.mxu0 0
    %859 = vmatpush1.bf16.msra.mxu0 %v839
    %860 = vmatprep.subr.bf16.mxu0 0
    %861 = vmatpush1.bf16.msra.mxu0 %v840
    %862 = vmatprep.subr.bf16.mxu0 0
    %863 = vmatpush1.bf16.msra.mxu0 %v841
    %864 = vmatprep.subr.bf16.mxu0 0
    %865 = vmatpush1.bf16.msra.mxu0 %v842
    %866 = vmatprep.subr.bf16.mxu0 0
    %867 = vmatpush1.bf16.msra.mxu0 %v843
    %868 = vmatprep.subr.bf16.mxu0 0
    %869 = vmatpush1.bf16.msra.mxu0 0
    %870 = vmatprep.subr.bf16.mxu0 0
    %871 = vmatpush1.bf16.msra.mxu0 0
    %872 = vmatprep.subr.bf16.mxu0 0
    %873 = vmatpush1.bf16.msra.mxu0 0
    %874 = vmatprep.subr.bf16.mxu0 0
    %875 = vmatpush1.bf16.msra.mxu0 0
    %876 = vmatprep.subr.bf16.mxu0 0
    %877 = vmatpush1.bf16.msra.mxu0 0
    %878 = vmatprep.subr.bf16.mxu0 0
    %879 = vmatpush1.bf16.msra.mxu0 0
    %880 = vmatprep.subr.bf16.mxu0 0
    %881 = vmatpush1.bf16.msra.mxu0 0
    %882 = vmatprep.subr.bf16.mxu0 0
    %883 = vmatpush1.bf16.msra.mxu0 0
    %884 = vmatprep.mubr.bf16.mxu0 0
    %885 = vmatmul.mubr.bf16.gmra.mrb[0].mxu0 %v780
    %v886 = vpop.f32.mrb[0].mxu0
    %v887 = vadd.f32 %v802, %v886
    %v888 = vpop.f32.mrb[0].mxu0
    %v889 = vpop.f32.mrb[0].mxu0
    %v890 = vpop.f32.mrb[0].mxu0
    %891 = vdwg.mxu0
    %892 = vst [vmem:[#allocation8] sm:$0xff] %v887
    // Predicated region
    $region38: #{tpu_custom_call.1} parent=1 // pred_check
      _
    $region39: #{tpu_custom_call.1} parent=1 // pred_check_branch
      %894 = sbr.rel (0) target = $region41
    $region40: #{tpu_custom_call.1} parent=1 // pred_region
      %s896 = ssub.s32 128, 128
      %897 = vsyncadd [#allocation4], %s896
      %s899 = sshll.u32 [#allocation8], 4
      %s900 = int_to_ptr.vmem [resolvable:$true] %s899
      %902 = dma.vmem_to_hbm [thread:$0]  %s900, 128, %s6, [#allocation4]
    $region41: #{tpu_custom_call.1} parent=1 // pred_fallthru
      _
    // Predicated region
    $region42: #{tpu_custom_call.1} parent=1 // pred_check
      _
    $region43: #{tpu_custom_call.1} parent=1 // pred_check_branch
      %904 = sbr.rel (0) target = $region45
    $region44: #{tpu_custom_call.1} parent=1 // pred_region
      %905 = dma.done [#allocation4], 128
    $region45: #{tpu_custom_call.1} parent=1 // pred_fallthru
      _
    %906 = vsyncpa [#allocation3], 1
    %907 = vsyncpa [#allocation6], 1
    %908 = vsyncpa [#allocation4], 1

</llo_original>
